<compile_context>
chip_gen: v7x
topology: tpu7x:2x2x1
jax: 0.10.0
libtpu: 0.0.40
codegen_flags: <defaults>
</compile_context>

<pallas_src>
import math

import jax
import jax.numpy as jnp
from jax.experimental import pallas as pl
from jax.experimental.pallas import tpu as pltpu


def _normalize_kernel(x_ref, ms_ref, o_ref):
    # x_ref: (tile_b, tile_n) in x dtype; ms_ref: (2, tile_n) f32
    x = x_ref[...].astype(jnp.float32)
    mean = ms_ref[0:1, :]        # (1, tile_n) -> broadcast over rows
    inv_std = ms_ref[1:2, :]     # (1, tile_n)
    o_ref[...] = ((x - mean) * inv_std).astype(o_ref.dtype)


def _round_up(x, m):
    return -(-x // m) * m


def _round_down(x, m):
    return (x // m) * m


def _multi_tensorcore_chip():
    """Best-effort: does this chip have >1 TensorCore (v7x / megacore gens)?"""
    try:
        kind = jax.devices()[0].device_kind.lower()
    except Exception:
        return False
    return any(tag in kind for tag in ("v7", "7x", "v4", "v3", "v5p"))


def _pick_tiles(Bf, N, itemsize, budget_bytes, multi_tc):
    """Choose (tile_b, tile_n) so each streamed block is ~budget_bytes and
    (8,128)-legal: dims are multiples of the packing or equal the full dim."""
    pack = 8 * max(1, 4 // max(1, itemsize))  # f32 -> 8 rows, bf16 -> 16 rows
    if pack * N * itemsize <= budget_bytes:
        # Rows are narrow enough: tile only the batch axis.
        tile_n = N
        cap = max(pack, _round_down(budget_bytes // max(1, N * itemsize), pack))
        if Bf <= cap:
            tile_b = Bf
            if multi_tc and Bf > pack:
                # Keep >= 2 grid steps so both TensorCores stream concurrently.
                tile_b = max(pack, _round_up(pl.cdiv(Bf, 2), pack))
        else:
            tile_b = cap
    else:
        # Very wide rows: tile the feature (lane) axis too, in multiples of 128.
        tile_b = pack if Bf >= pack else Bf
        tile_n = max(128, _round_down(budget_bytes // max(1, tile_b * itemsize), 128))
        tile_n = min(tile_n, _round_up(N, 128))
    return tile_b, tile_n


def normalize_pallas(x, mean, std, *, tile_b=None, tile_n=None, donate_x=False,
                     block_budget_bytes=8 << 20):
    """x: (..., size); mean/std: (size,). Returns (x - mean) / std."""
    orig_shape = x.shape
    size = orig_shape[-1]
    assert mean.shape == (size,) and std.shape == (size,)

    # Flatten leading dims so the feature axis maps to TPU lanes.
    x2 = x.reshape(-1, size)
    B = x2.shape[0]

    # Tiny per-feature vectors: precompute in f32 once (exact 1/std, no approx).
    mean_f = mean.astype(jnp.float32)
    inv_std_f = 1.0 / std.astype(jnp.float32)

    # Lane-dense folding: if size is not a multiple of 128, fold k rows into the
    # lane dimension (when B allows) so stores are unmasked full-width vst.
    fold = 1
    if size % 128 != 0 and B > 1:
        k = 128 // math.gcd(size, 128)        # smallest k with (k*size) % 128 == 0
        if k > 1 and B % k == 0:
            fold = k
    if fold > 1:
        x2 = x2.reshape(B // fold, fold * size)
        mean_f = jnp.tile(mean_f, fold)
        inv_std_f = jnp.tile(inv_std_f, fold)
    Bf, N = x2.shape

    ms = jnp.stack([mean_f, inv_std_f], axis=0)  # (2, N) f32

    itemsize = jnp.dtype(x.dtype).itemsize
    auto_b, auto_n = _pick_tiles(Bf, N, itemsize, block_budget_bytes,
                                 _multi_tensorcore_chip())
    tile_b = auto_b if tile_b is None else min(tile_b, Bf)
    tile_n = auto_n if tile_n is None else min(tile_n, N)

    grid = (pl.cdiv(Bf, tile_b), pl.cdiv(N, tile_n))

    out = pl.pallas_call(
        _normalize_kernel,
        out_shape=jax.ShapeDtypeStruct((Bf, N), x.dtype),
        grid_spec=pltpu.PrefetchScalarGridSpec(
            num_scalar_prefetch=0,
            grid=grid,
            in_specs=[
                pl.BlockSpec((tile_b, tile_n), lambda i, j: (i, j)),
                pl.BlockSpec((2, tile_n), lambda i, j: (0, j)),
            ],
            out_specs=pl.BlockSpec((tile_b, tile_n), lambda i, j: (i, j)),
        ),
        compiler_params=pltpu.CompilerParams(
            dimension_semantics=("parallel", "arbitrary"),
            vmem_limit_bytes=48 << 20,
        ),
        # Allocator / footprint relief only (does not change HBM traffic). Only
        # enable when the caller truly no longer needs x.
        input_output_aliases=({0: 0} if donate_x else {}),
    )(x2, ms)
    return out.reshape(orig_shape)


if __name__ == "__main__":
    key = jax.random.PRNGKey(0)

    def ref_normalize(x, mean, std):
        return (x - mean[None, :].reshape((1,) * (x.ndim - 1) + (-1,))) / \
               std.reshape((1,) * (x.ndim - 1) + (-1,))

    # Case 1: lane-dense feature dim (size % 128 == 0), small batch.
    batch, size = 16, 128
    k1, k2 = jax.random.split(key)
    x1 = jax.random.normal(k1, (batch, size), dtype=jnp.float32)
    mean1 = jnp.linspace(-1.0, 1.0, size, dtype=jnp.float32)
    std1 = jnp.linspace(0.5, 1.5, size, dtype=jnp.float32)
    out1 = jax.block_until_ready(normalize_pallas(x1, mean1, std1))
    ref1 = ref_normalize(x1, mean1, std1)
    assert out1.shape == x1.shape and out1.dtype == x1.dtype
    assert jnp.allclose(out1, ref1, rtol=1e-5, atol=1e-6), "case1 mismatch"

    # Case 2: 4-D input with small feature dim (exercises lane-dense folding).
    x2 = jax.random.normal(k2, (2, 4, 16, 16), dtype=jnp.float32)
    size2 = x2.shape[-1]
    mean2 = jnp.linspace(-0.5, 0.5, size2, dtype=jnp.float32)
    std2 = jnp.linspace(0.75, 1.25, size2, dtype=jnp.float32)
    out2 = jax.block_until_ready(normalize_pallas(x2, mean2, std2))
    ref2 = ref_normalize(x2, mean2, std2)
    assert out2.shape == x2.shape and out2.dtype == x2.dtype
    assert jnp.allclose(out2, ref2, rtol=1e-5, atol=1e-6), "case2 mismatch"

    # Case 3: ragged batch / non-128 feature dim where folding does not apply
    # (exercises cdiv grid with a partial last block).
    x3 = jax.random.normal(key, (10, 48), dtype=jnp.float32)
    mean3 = jnp.linspace(-2.0, 2.0, 48, dtype=jnp.float32)
    std3 = jnp.linspace(0.9, 1.1, 48, dtype=jnp.float32)
    out3 = jax.block_until_ready(normalize_pallas(x3, mean3, std3))
    ref3 = ref_normalize(x3, mean3, std3)
    assert jnp.allclose(out3, ref3, rtol=1e-5, atol=1e-6), "case3 mismatch"

    print("KERNEL_OK")
</pallas_src>

<mosaic_0001>
module attributes {stable_mosaic.version = 11 : i64} {
  func.func @_normalize_kernel(%arg0: i32, %arg1: i32, %arg2: memref<16x128xf32, #tpu.memory_space<vmem>>, %arg3: memref<2x128xf32, #tpu.memory_space<vmem>>, %arg4: memref<16x128xf32, #tpu.memory_space<vmem>>) attributes {dimension_semantics = [#tpu.dimension_semantics<parallel>, #tpu.dimension_semantics<arbitrary>], iteration_bounds = array<i64: 1, 1>, scalar_prefetch = 0 : i64, scratch_operands = 0 : i64, tpu.core_type = #tpu.core_type<tc>, window_params = [{transform_indices = @transform_0, window_bounds = array<i64: 16, 128>}, {transform_indices = @transform_1, window_bounds = array<i64: 2, 128>}, {transform_indices = @transform_2, window_bounds = array<i64: 16, 128>}]} {
    %c0 = arith.constant 0 : index
    %c0_0 = arith.constant 0 : index
    %0 = vector.load %arg2[%c0, %c0_0] : memref<16x128xf32, #tpu.memory_space<vmem>>, vector<16x128xf32>
    %c0_1 = arith.constant 0 : index
    %c0_2 = arith.constant 0 : index
    %1 = vector.load %arg3[%c0_1, %c0_2] : memref<2x128xf32, #tpu.memory_space<vmem>>, vector<1x128xf32>
    %c1 = arith.constant 1 : index
    %c0_3 = arith.constant 0 : index
    %2 = vector.load %arg3[%c1, %c0_3] : memref<2x128xf32, #tpu.memory_space<vmem>>, vector<1x128xf32>
    %3 = vector.broadcast %1 : vector<1x128xf32> to vector<16x128xf32>
    %4 = arith.subf %0, %3 : vector<16x128xf32>
    %5 = vector.broadcast %2 : vector<1x128xf32> to vector<16x128xf32>
    %6 = arith.mulf %4, %5 : vector<16x128xf32>
    %c0_4 = arith.constant 0 : index
    %c0_5 = arith.constant 0 : index
    %7 = vector.load %arg4[%c0_4, %c0_5] : memref<16x128xf32, #tpu.memory_space<vmem>>, vector<16x128xf32>
    tpu.vector_store %arg4[%c0_4, %c0_5], %6 {strides = array<i32>} : memref<16x128xf32, #tpu.memory_space<vmem>>, vector<16x128xf32>,
    return
  }
  func.func @transform_0(%arg0: i32, %arg1: i32) -> (i32, i32) {
    %c0_i32 = arith.constant 0 : i32
    return %arg0, %arg1 : i32, i32
  }
  func.func @transform_1(%arg0: i32, %arg1: i32) -> (i32, i32) {
    %c0_i32 = arith.constant 0 : i32
    %c0_i32_0 = arith.constant 0 : i32
    return %c0_i32, %arg1 : i32, i32
  }
  func.func @transform_2(%arg0: i32, %arg1: i32) -> (i32, i32) {
    %c0_i32 = arith.constant 0 : i32
    return %arg0, %arg1 : i32, i32
  }
}

</mosaic_0001>

<llo_original>
// kernel: tpu_custom_call.1
$region0: #{tpu_custom_call.1}
  #allocation0 [shape = 'u32[]', space=smem, size = 0x4, offset = 0x4, fixed_abs, tag = 'smem constant byte address 0x4 - core index']
  #allocation1 [shape = 'u32[144,128]{1,0:T(1,128)}', space=vmem, size = 0x12000, scoped, tag = 'internal scratch']
  %s0 = inlined_call_operand.hbm [shape: f32[16,128], index: 0, kind: input, shape index: {}]
  %s1 = inlined_call_operand.vmem [shape: f32[2,128], index: 1, kind: input, shape index: {}]
  %s2 = inlined_call_operand.hbm [shape: f32[16,128], index: 2, kind: output, shape index: {}]
  %s3 = sld [smem:[#allocation0]]
  $region22: #{tpu_custom_call.1} parent=0
    _
  %s5 = ssub.s32 1, %s3
  %s6 = scalar_select 0, %s5, %s3
  $region1: #{tpu_custom_call.1} parent=0
    #allocation2 [shape = 'u8[8192]{0}', space=vmem, size = 0x2000, scoped, tag = 'input window, operand 0, single buffered']
    #allocation3 [shape = 's32[1]{0}', space=sflag, size = 0x4, scoped, tag = 'scoped memory for tpu_custom_call.1']
    #allocation4 [shape = 's32[1]{0}', space=sflag, size = 0x4, scoped, tag = 'scoped memory for tpu_custom_call.1']
    #allocation5 [shape = 'u8[8192]{0}', space=vmem, size = 0x2000, scoped, tag = 'output window, operand 0, single buffered']
    %7 = vsyncpa [#allocation3], 0
    %8 = vsyncpa [#allocation4], 0
    // Predicated region
    $region2: #{tpu_custom_call.1} parent=1 // pred_check
      _
    $region3: #{tpu_custom_call.1} parent=1 // pred_check_branch
      %10 = sbr.rel (0) target = $region5
    $region4: #{tpu_custom_call.1} parent=1 // pred_region
      %s12 = ssub.s32 256, 256
      %13 = vsyncadd [#allocation3], %s12
      %s14 = sshll.u32 [#allocation2], 4
      %s15 = int_to_ptr.vmem [resolvable:$true] %s14
      %20 = dma.hbm_to_vmem [thread:$0]  %s0, 256, %s15, [#allocation3], 128, 128, 8
    $region5: #{tpu_custom_call.1} parent=1 // pred_fallthru
      _
    // Predicated region
    $region6: #{tpu_custom_call.1} parent=1 // pred_check
      _
    $region7: #{tpu_custom_call.1} parent=1 // pred_check_branch
      %22 = sbr.rel (0) target = $region9
    $region8: #{tpu_custom_call.1} parent=1 // pred_region
      _
    $region9: #{tpu_custom_call.1} parent=1 // pred_fallthru
      _
    // Predicated region
    $region10: #{tpu_custom_call.1} parent=1 // pred_check
      _
    $region11: #{tpu_custom_call.1} parent=1 // pred_check_branch
      %24 = sbr.rel (0) target = $region13
    $region12: #{tpu_custom_call.1} parent=1 // pred_region
      %25 = dma.done [#allocation3], 256
    $region13: #{tpu_custom_call.1} parent=1 // pred_fallthru
      _
    %v26 = vld [vmem:[#allocation2] sm:$0xff]
    %v27 = vld [vmem:[#allocation2 + $0x8] sm:$0xff]
    %v28 = vld [vmem:[%s1] sm:$0x1]
    %v29 = vld [vmem:[%s1 + $0x1] sm:$0x1]
    %v30 = vlaneseq
    %v31 = vshrl.u32 %v30, 7
    %v32 = vsub.s32 0, %v31
    %v33 = vrot.slane %v28, %v32
    %v34 = vsub.f32 %v26, %v33
    %v35 = vsub.f32 %v27, %v33
    %v36 = vlaneseq
    %v37 = vshrl.u32 %v36, 7
    %v38 = vsub.s32 0, %v37
    %v39 = vrot.slane %v29, %v38
    %v40 = vmul.f32 %v34, %v39
    %v41 = vmul.f32 %v35, %v39
    %42 = vst [vmem:[#allocation5] sm:$0xff] %v40
    %43 = vst [vmem:[#allocation5 + $0x8] sm:$0xff] %v41
    // Predicated region
    $region14: #{tpu_custom_call.1} parent=1 // pred_check
      _
    $region15: #{tpu_custom_call.1} parent=1 // pred_check_branch
      %45 = sbr.rel (0) target = $region17
    $region16: #{tpu_custom_call.1} parent=1 // pred_region
      %s47 = ssub.s32 256, 256
      %48 = vsyncadd [#allocation4], %s47
      %s49 = sshll.u32 [#allocation5], 4
      %s50 = int_to_ptr.vmem [resolvable:$true] %s49
      %55 = dma.vmem_to_hbm [thread:$0]  %s50, 256, %s2, [#allocation4], 128, 128, 8
    $region17: #{tpu_custom_call.1} parent=1 // pred_fallthru
      _
    // Predicated region
    $region18: #{tpu_custom_call.1} parent=1 // pred_check
      _
    $region19: #{tpu_custom_call.1} parent=1 // pred_check_branch
      %57 = sbr.rel (0) target = $region21
    $region20: #{tpu_custom_call.1} parent=1 // pred_region
      %58 = dma.done [#allocation4], 256
    $region21: #{tpu_custom_call.1} parent=1 // pred_fallthru
      _
    %59 = vsyncpa [#allocation3], 1
    %60 = vsyncpa [#allocation4], 1

</llo_original>
